<compile_context>
chip_gen: v5e
topology: v5e:2x2
jax: 0.10.0
libtpu: 0.0.40
codegen_flags: <defaults>
</compile_context>

<pallas_src>
import jax
import jax.numpy as jnp
from jax import lax
from jax.experimental import pallas as pl
from jax.experimental.pallas import tpu as pltpu


def _ceil_to(x: int, m: int) -> int:
    return -(-x // m) * m


# ---------------------------------------------------------------------------
# Primary kernel: VMEM-resident tables, on-chip one-hot gather on the MXU.
# ---------------------------------------------------------------------------
def _mf_resident_kernel(uidx_ref, iidx_ref,     # VMEM: (1, tile_b) int32 index tiles
                        utblT_ref, itblT_ref,   # VMEM-resident: (D_aug, V_pad) f32
                        out_ref):               # VMEM: (1, tile_b) f32, lane-dense
    tile_b = uidx_ref.shape[1]
    vu = utblT_ref.shape[1]
    vi = itblT_ref.shape[1]

    u_idx = uidx_ref[...]                                    # (1, tile_b) int32
    i_idx = iidx_ref[...]

    # On-chip gather as one-hot matmuls (MXU; no per-row DMAs).  One-hots are
    # built directly in "vocab x batch" layout so the gathered rows come out
    # (D_aug, tile_b): batch is already the lane dimension.
    u_oh = (lax.broadcasted_iota(jnp.int32, (vu, tile_b), 0) == u_idx
            ).astype(utblT_ref.dtype)
    i_oh = (lax.broadcasted_iota(jnp.int32, (vi, tile_b), 0) == i_idx
            ).astype(itblT_ref.dtype)
    u_rows = jnp.dot(utblT_ref[...], u_oh, preferred_element_type=jnp.float32)
    i_rows = jnp.dot(itblT_ref[...], i_oh, preferred_element_type=jnp.float32)

    # Per-pair dot over the (bias-augmented) latent dim: a sublane reduce that
    # writes straight into the lane-dense (1, tile_b) output block.
    out_ref[...] = jnp.sum(u_rows * i_rows, axis=0, keepdims=True
                           ).astype(out_ref.dtype)


# ---------------------------------------------------------------------------
# Fallback kernel (tables too large for VMEM): per-row DMA gather from HBM
# with an unrolled issue loop and a single aggregated wait per table.
# ---------------------------------------------------------------------------
def _mf_dma_gather_kernel(uidx_ref, iidx_ref,          # SMEM prefetch: (B_pad,) int32
                          user_tbl_ref, item_tbl_ref,  # HBM (pl.ANY): (V, D_aug) f32
                          out_ref,                     # VMEM: (1, tile_b) f32
                          urows_ref, irows_ref,        # VMEM scratch: (tile_b, D_aug)
                          sem_ref):                    # DMA semaphores: (2,)
    tile_b = urows_ref.shape[0]
    base = pl.program_id(0) * tile_b

    # Issue all row-gather DMAs for this tile.  Unrolled so scalar index loads
    # and descriptor pushes co-issue (descriptor issue is the binding slot).
    def issue(r, carry):
        u = uidx_ref[base + r]
        it = iidx_ref[base + r]
        pltpu.make_async_copy(user_tbl_ref.at[u], urows_ref.at[r], sem_ref.at[0]).start()
        pltpu.make_async_copy(item_tbl_ref.at[it], irows_ref.at[r], sem_ref.at[1]).start()
        return carry

    lax.fori_loop(0, tile_b, issue, 0, unroll=8)

    # Aggregated drain: DMA semaphores count bytes, so one wait whose
    # descriptor spans the whole (tile_b, D_aug) scratch covers all tile_b row
    # copies issued on that semaphore (vs 2*tile_b serialized waits before).
    pltpu.make_async_copy(urows_ref, urows_ref, sem_ref.at[0]).wait()
    pltpu.make_async_copy(irows_ref, irows_ref, sem_ref.at[1]).wait()

    dot = jnp.sum(urows_ref[...] * irows_ref[...], axis=1)   # (tile_b,)
    out_ref[...] = dot.reshape(1, tile_b).astype(out_ref.dtype)


# ---------------------------------------------------------------------------
# Wrapper
# ---------------------------------------------------------------------------
def mf_forward_pallas(user_indices, item_indices, params, global_rating, *,
                      use_bias=True, tile_b=None, force_dma_gather=False,
                      resident_vmem_budget=40 * 1024 * 1024):
    """MFModel.forward:
       biased:   rating = item_bias + user_bias + global_rating + <u, v>
       unbiased: rating = <u, v>
    """
    user_tbl = params["embedding_user"].astype(jnp.float32)      # (num_user, D)
    item_tbl = params["embedding_item"].astype(jnp.float32)      # (num_item, D)
    num_user, _ = user_tbl.shape
    num_item = item_tbl.shape[0]
    B = int(user_indices.shape[0])

    # Bias fusion: fold user/item biases + global rating into 2 extra columns:
    #   user row: [u_emb, u_bias, 1]       item row: [i_emb, 1, i_bias + g]
    #   sum(user_row * item_row) = <u_emb, i_emb> + u_bias + i_bias + g
    if use_bias:
        ub = params["embedding_user_biases"].astype(jnp.float32).reshape(num_user, 1)
        ib = params["embedding_item_biases"].astype(jnp.float32).reshape(num_item, 1)
        g = jnp.asarray(global_rating, jnp.float32)
        user_aug = jnp.concatenate(
            [user_tbl, ub, jnp.ones((num_user, 1), jnp.float32)], axis=1)
        item_aug = jnp.concatenate(
            [item_tbl, jnp.ones((num_item, 1), jnp.float32), ib + g], axis=1)
    else:
        user_aug, item_aug = user_tbl, item_tbl
    d_aug = user_aug.shape[1]

    # Batch tiling: tile_b multiple of 128 (lane-dense output), big enough to
    # amortize the ~0.35us/grid-step overhead, but keep >= 2 tiles when
    # possible so v7x's two TensorCores both get work.
    if tile_b is None:
        tile_b = min(2048, max(128, _ceil_to(_ceil_to(B, 2) // 2, 128)))
    assert tile_b % 128 == 0, "tile_b must be a multiple of 128"
    b_pad = _ceil_to(B, tile_b)
    num_tiles = b_pad // tile_b

    uidx = jnp.zeros((1, b_pad), jnp.int32).at[0, :B].set(user_indices.astype(jnp.int32))
    iidx = jnp.zeros((1, b_pad), jnp.int32).at[0, :B].set(item_indices.astype(jnp.int32))

    vu_pad = _ceil_to(num_user, 128)   # MXU contraction dim: 128 is v5e-native,
    vi_pad = _ceil_to(num_item, 128)   # and fine on v6e/v7x's 256-wide MXU too.
    d8 = _ceil_to(d_aug, 8)

    # Resident-path VMEM footprint (tables + one-hots + gathered rows + blocks);
    # used for path selection AND for an explicit vmem_limit_bytes (v7x only
    # has 64 MiB physical VMEM vs 128 MiB on v5e/v6e).
    resident_bytes = 4 * (
        d8 * (vu_pad + vi_pad)              # resident (transposed) tables
        + (vu_pad + vi_pad) * tile_b        # one-hot gather matrices
        + 4 * d8 * tile_b                   # gathered rows + product temps
        + 6 * 8 * tile_b                    # idx / out blocks (double-buffered)
    )
    use_resident = (not force_dma_gather) and resident_bytes <= resident_vmem_budget

    if use_resident:
        vmem_limit = int(min(64 * 1024 * 1024,
                             max(32 * 1024 * 1024, resident_bytes + 8 * 1024 * 1024)))
        # Pre-transpose + row-pad the tables: (D_aug, V_pad), vocab on lanes.
        user_res = jnp.zeros((d_aug, vu_pad), jnp.float32).at[:, :num_user].set(user_aug.T)
        item_res = jnp.zeros((d_aug, vi_pad), jnp.float32).at[:, :num_item].set(item_aug.T)

        dots = pl.pallas_call(
            _mf_resident_kernel,
            out_shape=jax.ShapeDtypeStruct((1, b_pad), jnp.float32),
            grid=(num_tiles,),
            in_specs=[
                pl.BlockSpec((1, tile_b), lambda i: (0, i)),        # user idx tile
                pl.BlockSpec((1, tile_b), lambda i: (0, i)),        # item idx tile
                pl.BlockSpec((d_aug, vu_pad), lambda i: (0, 0)),    # resident user table
                pl.BlockSpec((d_aug, vi_pad), lambda i: (0, 0)),    # resident item table
            ],
            out_specs=pl.BlockSpec((1, tile_b), lambda i: (0, i)),
            compiler_params=pltpu.CompilerParams(
                dimension_semantics=("parallel",),
                vmem_limit_bytes=vmem_limit),
        )(uidx, iidx, user_res, item_res)
    else:
        # Large-table fallback: per-row DMA gather from HBM (tables stay put).
        # TODO(synk): double-buffer the gather across batch tiles (carry state
        # across grid steps) to hide DMA latency, and tile the index arrays out
        # of SMEM scalar-prefetch for very large batches.
        fallback_vmem = int(min(
            64 * 1024 * 1024,
            max(32 * 1024 * 1024,
                2 * 2 * tile_b * _ceil_to(d_aug, 128) * 4 + 4 * 8 * tile_b * 4)))
        grid_spec = pltpu.PrefetchScalarGridSpec(
            num_scalar_prefetch=2,                       # user idx, item idx -> SMEM
            grid=(num_tiles,),
            in_specs=[
                pl.BlockSpec(memory_space=pl.ANY),       # user table stays in HBM
                pl.BlockSpec(memory_space=pl.ANY),       # item table stays in HBM
            ],
            out_specs=pl.BlockSpec((1, tile_b), lambda i, u, it: (0, i)),
            scratch_shapes=[
                pltpu.VMEM((tile_b, d_aug), jnp.float32),
                pltpu.VMEM((tile_b, d_aug), jnp.float32),
                pltpu.SemaphoreType.DMA((2,)),
            ],
        )
        dots = pl.pallas_call(
            _mf_dma_gather_kernel,
            out_shape=jax.ShapeDtypeStruct((1, b_pad), jnp.float32),
            grid_spec=grid_spec,
            compiler_params=pltpu.CompilerParams(
                dimension_semantics=("parallel",),
                vmem_limit_bytes=fallback_vmem),
        )(uidx.reshape(b_pad), iidx.reshape(b_pad), user_aug, item_aug)

    return dots.reshape(b_pad)[:B]


def mf_forward_reference(user_indices, item_indices, params, global_rating,
                         use_bias=True):
    """Pure-JAX reference of the PyTorch forward."""
    ue = jnp.take(params["embedding_user"], user_indices, axis=0)
    ie = jnp.take(params["embedding_item"], item_indices, axis=0)
    dot = jnp.sum(ue * ie, axis=1)
    if not use_bias:
        return dot
    ub = jnp.take(params["embedding_user_biases"], user_indices, axis=0)[:, 0]
    ib = jnp.take(params["embedding_item_biases"], item_indices, axis=0)[:, 0]
    return ib + ub + jnp.float32(global_rating) + dot


if __name__ == "__main__":
    key = jax.random.PRNGKey(0)
    num_user, num_item = 50, 40
    latent_dim = 32          # self._latent_dim
    batch = 300              # exercises padding + 2 tiles (tile_b=256)

    k1, k2, k3, k4, k5, k6, k7 = jax.random.split(key, 7)

    # torch.nn.Embedding default init: N(0, 1)
    params = {
        "embedding_user":        jax.random.normal(k1, (num_user, latent_dim), jnp.float32),
        "embedding_item":        jax.random.normal(k2, (num_item, latent_dim), jnp.float32),
        "embedding_user_biases": jax.random.normal(k3, (num_user, 1), jnp.float32),
        "embedding_item_biases": jax.random.normal(k4, (num_item, 1), jnp.float32),
    }

    user_indices = jax.random.randint(k5, (batch,), 0, num_user, jnp.int32)
    item_indices = jax.random.randint(k6, (batch,), 0, num_item, jnp.int32)

    # global_rating: mean of nonzero synthetic ratings (as in the torch property)
    ratings = jax.random.uniform(k7, (64,), jnp.float32, 1.0, 5.0)
    global_rating = float(jnp.mean(ratings[ratings != 0]))

    # Biased path (module default) — VMEM-resident gather kernel.
    out_b = mf_forward_pallas(user_indices, item_indices, params, global_rating,
                              use_bias=True)
    out_b = jax.block_until_ready(out_b)
    ref_b = mf_forward_reference(user_indices, item_indices, params, global_rating,
                                 use_bias=True)
    assert out_b.shape == (batch,)
    assert jnp.allclose(out_b, ref_b, atol=1e-4, rtol=1e-4), (out_b, ref_b)

    # Un-biased path (is_use_bias=False).
    out_nb = mf_forward_pallas(user_indices, item_indices, params, global_rating,
                               use_bias=False)
    out_nb = jax.block_until_ready(out_nb)
    ref_nb = mf_forward_reference(user_indices, item_indices, params, global_rating,
                                  use_bias=False)
    assert jnp.allclose(out_nb, ref_nb, atol=1e-4, rtol=1e-4), (out_nb, ref_nb)

    # Large-table fallback path (per-row DMA gather, aggregated drain).
    out_dma = mf_forward_pallas(user_indices, item_indices, params, global_rating,
                                use_bias=True, force_dma_gather=True)
    out_dma = jax.block_until_ready(out_dma)
    assert jnp.allclose(out_dma, ref_b, atol=1e-4, rtol=1e-4), (out_dma, ref_b)

    print("KERNEL_OK")
</pallas_src>

<mosaic_0001>
module attributes {stable_mosaic.version = 11 : i64} {
  func.func @_mf_resident_kernel(%arg0: i32, %arg1: memref<1x256xi32, #tpu.memory_space<vmem>>, %arg2: memref<1x256xi32, #tpu.memory_space<vmem>>, %arg3: memref<34x128xf32, #tpu.memory_space<vmem>>, %arg4: memref<34x128xf32, #tpu.memory_space<vmem>>, %arg5: memref<1x256xf32, #tpu.memory_space<vmem>>) attributes {dimension_semantics = [#tpu.dimension_semantics<parallel>], iteration_bounds = array<i64: 2>, scalar_prefetch = 0 : i64, scratch_operands = 0 : i64, tpu.core_type = #tpu.core_type<tc>, window_params = [{transform_indices = @transform_0, window_bounds = array<i64: 1, 256>}, {transform_indices = @transform_1, window_bounds = array<i64: 1, 256>}, {pipeline_mode = #tpu.pipeline_mode<synchronous>, transform_indices = @transform_2, window_bounds = array<i64: 34, 128>}, {pipeline_mode = #tpu.pipeline_mode<synchronous>, transform_indices = @transform_3, window_bounds = array<i64: 34, 128>}, {transform_indices = @transform_4, window_bounds = array<i64: 1, 256>}]} {
    %c0 = arith.constant 0 : index
    %c0_0 = arith.constant 0 : index
    %0 = vector.load %arg1[%c0, %c0_0] : memref<1x256xi32, #tpu.memory_space<vmem>>, vector<1x256xi32>
    %c0_1 = arith.constant 0 : index
    %c0_2 = arith.constant 0 : index
    %1 = vector.load %arg2[%c0_1, %c0_2] : memref<1x256xi32, #tpu.memory_space<vmem>>, vector<1x256xi32>
    %2 = tpu.iota {dimensions = array<i32: 0>} : vector<128x256xi32>
    %3 = vector.broadcast %0 : vector<1x256xi32> to vector<128x256xi32>
    %4 = arith.cmpi eq, %2, %3 : vector<128x256xi32>
    %5 = arith.extui %4 : vector<128x256xi1> to vector<128x256xi32>
    %6 = arith.sitofp %5 : vector<128x256xi32> to vector<128x256xf32>
    %7 = tpu.iota {dimensions = array<i32: 0>} : vector<128x256xi32>
    %8 = vector.broadcast %1 : vector<1x256xi32> to vector<128x256xi32>
    %9 = arith.cmpi eq, %7, %8 : vector<128x256xi32>
    %10 = arith.extui %9 : vector<128x256xi1> to vector<128x256xi32>
    %11 = arith.sitofp %10 : vector<128x256xi32> to vector<128x256xf32>
    %c0_3 = arith.constant 0 : index
    %c0_4 = arith.constant 0 : index
    %12 = vector.load %arg3[%c0_3, %c0_4] : memref<34x128xf32, #tpu.memory_space<vmem>>, vector<34x128xf32>
    %cst = arith.constant dense<0.000000e+00> : vector<34x256xf32>
    %13 = tpu.matmul %12, %6, %cst {dimension_numbers = #tpu.dot_dimension_numbers<[1], [0], [0], [1], [0, 0, 1, 1], [], []>} : vector<34x128xf32>, vector<128x256xf32>, vector<34x256xf32> -> vector<34x256xf32>
    %c0_5 = arith.constant 0 : index
    %c0_6 = arith.constant 0 : index
    %14 = vector.load %arg4[%c0_5, %c0_6] : memref<34x128xf32, #tpu.memory_space<vmem>>, vector<34x128xf32>
    %cst_7 = arith.constant dense<0.000000e+00> : vector<34x256xf32>
    %15 = tpu.matmul %14, %11, %cst_7 {dimension_numbers = #tpu.dot_dimension_numbers<[1], [0], [0], [1], [0, 0, 1, 1], [], []>} : vector<34x128xf32>, vector<128x256xf32>, vector<34x256xf32> -> vector<34x256xf32>
    %16 = arith.mulf %13, %15 : vector<34x256xf32>
    %cst_8 = arith.constant dense<0.000000e+00> : vector<256xf32>
    %17 = vector.multi_reduction <add>, %16, %cst_8 [0] : vector<34x256xf32> to vector<256xf32>
    %18 = vector.shape_cast %17 : vector<256xf32> to vector<1x256xf32>
    %c0_9 = arith.constant 0 : index
    %c0_10 = arith.constant 0 : index
    %19 = vector.load %arg5[%c0_9, %c0_10] : memref<1x256xf32, #tpu.memory_space<vmem>>, vector<1x256xf32>
    tpu.vector_store %arg5[%c0_9, %c0_10], %18 {strides = array<i32>} : memref<1x256xf32, #tpu.memory_space<vmem>>, vector<1x256xf32>,
    return
  }
  func.func @transform_0(%arg0: i32) -> (i32, i32) {
    %c0_i32 = arith.constant 0 : i32
    %c0_i32_0 = arith.constant 0 : i32
    return %c0_i32, %arg0 : i32, i32
  }
  func.func @transform_1(%arg0: i32) -> (i32, i32) {
    %c0_i32 = arith.constant 0 : i32
    %c0_i32_0 = arith.constant 0 : i32
    return %c0_i32, %arg0 : i32, i32
  }
  func.func @transform_2(%arg0: i32) -> (i32, i32) {
    %c0_i32 = arith.constant 0 : i32
    %c0_i32_0 = arith.constant 0 : i32
    %c0_i32_1 = arith.constant 0 : i32
    return %c0_i32, %c0_i32_0 : i32, i32
  }
  func.func @transform_3(%arg0: i32) -> (i32, i32) {
    %c0_i32 = arith.constant 0 : i32
    %c0_i32_0 = arith.constant 0 : i32
    %c0_i32_1 = arith.constant 0 : i32
    return %c0_i32, %c0_i32_0 : i32, i32
  }
  func.func @transform_4(%arg0: i32) -> (i32, i32) {
    %c0_i32 = arith.constant 0 : i32
    %c0_i32_0 = arith.constant 0 : i32
    return %c0_i32, %arg0 : i32, i32
  }
}

</mosaic_0001>

<llo_original>
// kernel: tpu_custom_call.1
$region0: #{tpu_custom_call.1}
  #allocation0 [shape = 'u32[]', space=smem, size = 0x4, offset = 0x4, fixed_abs, tag = 'smem constant byte address 0x4 - core index']
  #allocation1 [shape = 'u32[72,128]{1,0:T(1,128)}', space=vmem, size = 0x9000, scoped, tag = 'internal scratch']
  %s0 = inlined_call_operand.hbm [shape: s32[1,512], index: 0, kind: input, shape index: {}]
  %s1 = inlined_call_operand.hbm [shape: s32[1,512], index: 1, kind: input, shape index: {}]
  %s2 = inlined_call_operand.hbm [shape: f32[34,128], index: 2, kind: input, shape index: {}]
  %s3 = inlined_call_operand.hbm [shape: f32[34,128], index: 3, kind: input, shape index: {}]
  %s4 = inlined_call_operand.hbm [shape: f32[1,512], index: 4, kind: output, shape index: {}]
  %s5 = sld [smem:[#allocation0]]
  $region65: #{tpu_custom_call.1} parent=0
    _
  %s7 = ssub.s32 1, %s5
  %s8 = scalar_select 0, %s7, %s5
  $region1: #{tpu_custom_call.1} parent=0
    #allocation2 [shape = 'u8[2048]{0}', space=vmem, size = 0x800, scoped, tag = 'input window, operand 0']
    #allocation3 [shape = 's32[2]{0}', space=sflag, size = 0x8, scoped, tag = 'scoped memory for tpu_custom_call.1']
    #allocation4 [shape = 's32[2]{0}', space=sflag, size = 0x8, scoped, tag = 'scoped memory for tpu_custom_call.1']
    #allocation5 [shape = 'u8[2048]{0}', space=vmem, size = 0x800, scoped, tag = 'input window, operand 1']
    #allocation6 [shape = 's32[2]{0}', space=sflag, size = 0x8, scoped, tag = 'scoped memory for tpu_custom_call.1']
    #allocation7 [shape = 'u8[20480]{0}', space=vmem, size = 0x5000, scoped, tag = 'input window, operand 2, single buffered']
    #allocation8 [shape = 'u8[20480]{0}', space=vmem, size = 0x5000, scoped, tag = 'input window, operand 3, single buffered']
    #allocation9 [shape = 's32[1]{0}', space=sflag, size = 0x4, scoped, tag = 'scoped memory for tpu_custom_call.1']
    #allocation10 [shape = 'u8[2048]{0}', space=vmem, size = 0x800, scoped, tag = 'output window, operand 0']
    %9 = vsyncpa [#allocation3], 0
    %s10 = scalar_lea.sflag [#allocation3], 1
    %11 = vsyncpa %s10, 0
    %12 = vsyncpa [#allocation6], 0
    %s13 = scalar_lea.sflag [#allocation6], 1
    %14 = vsyncpa %s13, 0
    %15 = vsyncpa [#allocation9], 0
    %16 = vsyncpa [#allocation4], 0
    %s17 = scalar_lea.sflag [#allocation4], 1
    %18 = vsyncpa %s17, 0
    loop: start=0, step=1, limit=4
    $region2: #{tpu_custom_call.1} parent=1 // loop_pre_header
      _
    $region3: #{tpu_custom_call.1} parent=1 // loop_header
      %s20 = sphi 0, %s24
      %p21 = scmp.ge.s32.totalorder %s20, 4
      %s30 = sphi 0, %s32
      %s33 = sphi 0, %s30
      %s34 = sphi 0, %s33
      %s50 = sphi 0, %s34
      %s56 = sphi 0, %s58
      %s59 = sphi 0, %s56
      %s60 = sphi 0, %s59
      %s76 = sphi 0, %s60
      %s80 = sphi 0, %s80
      %s82 = sphi 0, %s80
      %s83 = sphi 0, %s82
      %s97 = sphi 0, %s83
      %s101 = sphi 0, %s101
      %s103 = sphi 0, %s101
      %s104 = sphi 0, %s103
      %s118 = sphi 0, %s104
      %s124 = sphi 0, %s126
      %s127 = sphi 0, %s124
      %s128 = sphi 0, %s127
      %s144 = sphi 0, %s128
    $region4: #{tpu_custom_call.1} parent=1 // loop_header_branch
      %23 = sbr.rel (%p21) target = $region8
    $region5: #{tpu_custom_call.1} parent=1 // loop_body
      %s25 = ssub.s32 %s20, 1
      %s26 = ssub.s32 %s20, 2
      %s27 = sadd.s32 %s20, 1
      %s28 = ssub.s32 %s20, %s27
      %p29 = scmp.eq.s32.totalorder %s28, 0
      %s31 = sadd.s32 %s30, 1
      %s32 = scalar_select %p29, %s30, %s31
      %p35 = pneg %p29
      %p36 = scmp.eq.s32.totalorder %s20, 1
      %p37 = por %p35, %p36
      %p38 = scmp.ne.s32.totalorder %s30, %s33
      %p39 = scmp.eq.s32.totalorder %s20, 0
      %p40 = por %p38, %p39
      %p41 = scmp.ne.s32.totalorder %s30, %s33
      %p42 = scmp.eq.s32.totalorder %s25, 1
      %p43 = por %p41, %p42
      %p44 = scmp.ne.s32.totalorder %s33, %s34
      %p45 = scmp.eq.s32.totalorder %s25, 0
      %p46 = por %p44, %p45
      %p47 = scmp.ne.s32.totalorder %s33, %s34
      %p48 = scmp.eq.s32.totalorder %s26, 1
      %p49 = por %p47, %p48
      %p51 = scmp.ne.s32.totalorder %s34, %s50
      %p52 = scmp.eq.s32.totalorder %s26, 0
      %p53 = por %p51, %p52
      %s54 = ssub.s32 %s20, %s27
      %p55 = scmp.eq.s32.totalorder %s54, 0
      %s57 = sadd.s32 %s56, 1
      %s58 = scalar_select %p55, %s56, %s57
      %p61 = pneg %p55
      %p62 = scmp.eq.s32.totalorder %s20, 1
      %p63 = por %p61, %p62
      %p64 = scmp.ne.s32.totalorder %s56, %s59
      %p65 = scmp.eq.s32.totalorder %s20, 0
      %p66 = por %p64, %p65
      %p67 = scmp.ne.s32.totalorder %s56, %s59
      %p68 = scmp.eq.s32.totalorder %s25, 1
      %p69 = por %p67, %p68
      %p70 = scmp.ne.s32.totalorder %s59, %s60
      %p71 = scmp.eq.s32.totalorder %s25, 0
      %p72 = por %p70, %p71
      %p73 = scmp.ne.s32.totalorder %s59, %s60
      %p74 = scmp.eq.s32.totalorder %s26, 1
      %p75 = por %p73, %p74
      %p77 = scmp.ne.s32.totalorder %s60, %s76
      %p78 = scmp.eq.s32.totalorder %s26, 0
      %p79 = por %p77, %p78
      %s81 = sadd.s32 %s80, 1
      %p84 = scmp.eq.s32.totalorder %s20, 1
      %p85 = scmp.ne.s32.totalorder %s80, %s82
      %p86 = scmp.eq.s32.totalorder %s20, 0
      %p87 = por %p85, %p86
      %p88 = scmp.ne.s32.totalorder %s80, %s82
      %p89 = scmp.eq.s32.totalorder %s25, 1
      %p90 = por %p88, %p89
      %p91 = scmp.ne.s32.totalorder %s82, %s83
      %p92 = scmp.eq.s32.totalorder %s25, 0
      %p93 = por %p91, %p92
      %p94 = scmp.ne.s32.totalorder %s82, %s83
      %p95 = scmp.eq.s32.totalorder %s26, 1
      %p96 = por %p94, %p95
      %p98 = scmp.ne.s32.totalorder %s83, %s97
      %p99 = scmp.eq.s32.totalorder %s26, 0
      %p100 = por %p98, %p99
      %s102 = sadd.s32 %s101, 1
      %p105 = scmp.eq.s32.totalorder %s20, 1
      %p106 = scmp.ne.s32.totalorder %s101, %s103
      %p107 = scmp.eq.s32.totalorder %s20, 0
      %p108 = por %p106, %p107
      %p109 = scmp.ne.s32.totalorder %s101, %s103
      %p110 = scmp.eq.s32.totalorder %s25, 1
      %p111 = por %p109, %p110
      %p112 = scmp.ne.s32.totalorder %s103, %s104
      %p113 = scmp.eq.s32.totalorder %s25, 0
      %p114 = por %p112, %p113
      %p115 = scmp.ne.s32.totalorder %s103, %s104
      %p116 = scmp.eq.s32.totalorder %s26, 1
      %p117 = por %p115, %p116
      %p119 = scmp.ne.s32.totalorder %s104, %s118
      %p120 = scmp.eq.s32.totalorder %s26, 0
      %p121 = por %p119, %p120
      %s122 = ssub.s32 %s20, %s27
      %p123 = scmp.eq.s32.totalorder %s122, 0
      %s125 = sadd.s32 %s124, 1
      %s126 = scalar_select %p123, %s124, %s125
      %p129 = pneg %p123
      %p130 = scmp.eq.s32.totalorder %s20, 1
      %p131 = por %p129, %p130
      %p132 = scmp.ne.s32.totalorder %s124, %s127
      %p133 = scmp.eq.s32.totalorder %s20, 0
      %p134 = por %p132, %p133
      %p135 = scmp.ne.s32.totalorder %s124, %s127
      %p136 = scmp.eq.s32.totalorder %s25, 1
      %p137 = por %p135, %p136
      %p138 = scmp.ne.s32.totalorder %s127, %s128
      %p139 = scmp.eq.s32.totalorder %s25, 0
      %p140 = por %p138, %p139
      %p141 = scmp.ne.s32.totalorder %s127, %s128
      %p142 = scmp.eq.s32.totalorder %s26, 1
      %p143 = por %p141, %p142
      %p145 = scmp.ne.s32.totalorder %s128, %s144
      %p146 = scmp.eq.s32.totalorder %s26, 0
      %p147 = por %p145, %p146
      %p148 = scmp.le.s32.totalorder 1, %s20
      %p149 = scmp.lt.s32.totalorder %s20, 3
      %p150 = pnand %p148, %p149
      %p151 = pneg %p150
      // Predicated region
      $region9: #{tpu_custom_call.1} parent=5 // pred_check
        _
      $region10: #{tpu_custom_call.1} parent=5 // pred_check_branch
        %153 = sbr.rel (%p150) target = $region12
      $region11: #{tpu_custom_call.1} parent=5 // pred_region
        %s154 = ssub.s32 %s20, 1
        // Predicated region
        $region13: #{tpu_custom_call.1} parent=11 // pred_check
          %p155 = pneg %p93
        $region14: #{tpu_custom_call.1} parent=11 // pred_check_branch
          %157 = sbr.rel (%p155) target = $region16
        $region15: #{tpu_custom_call.1} parent=11 // pred_region
          %159 = vsyncadd [#allocation6], 0
          %s160 = sshll.u32 %s2, 4
          %s161 = int_to_ptr.hbm [resolvable:$true] %s160
          %s162 = sshll.u32 [#allocation7], 4
          %s163 = int_to_ptr.vmem [resolvable:$true] %s162
          %168 = dma.hbm_to_vmem [thread:$0]  %s161, 640, %s163, [#allocation6], 128, 128, 8
        $region16: #{tpu_custom_call.1} parent=11 // pred_fallthru
          _
        // Predicated region
        $region17: #{tpu_custom_call.1} parent=11 // pred_check
          %p169 = pneg %p114
        $region18: #{tpu_custom_call.1} parent=11 // pred_check_branch
          %171 = sbr.rel (%p169) target = $region20
        $region19: #{tpu_custom_call.1} parent=11 // pred_region
          %173 = vsyncadd [#allocation9], 0
          %s174 = sshll.u32 %s3, 4
          %s175 = int_to_ptr.hbm [resolvable:$true] %s174
          %s176 = sshll.u32 [#allocation8], 4
          %s177 = int_to_ptr.vmem [resolvable:$true] %s176
          %182 = dma.hbm_to_vmem [thread:$0]  %s175, 640, %s177, [#allocation9], 128, 128, 8
        $region20: #{tpu_custom_call.1} parent=11 // pred_fallthru
          _
      $region12: #{tpu_custom_call.1} parent=5 // pred_fallthru
        _
      %p183 = scmp.lt.s32.totalorder %s20, 2
      // Predicated region
      $region21: #{tpu_custom_call.1} parent=5 // pred_check
        %p184 = pneg %p183
      $region22: #{tpu_custom_call.1} parent=5 // pred_check_branch
        %186 = sbr.rel (%p184) target = $region24
      $region23: #{tpu_custom_call.1} parent=5 // pred_region
        // Predicated region
        $region25: #{tpu_custom_call.1} parent=23 // pred_check
          %p187 = pneg %p40
        $region26: #{tpu_custom_call.1} parent=23 // pred_check_branch
          %189 = sbr.rel (%p187) target = $region28
        $region27: #{tpu_custom_call.1} parent=23 // pred_region
          %s190 = sand.u32 %s30, 1
          %s191 = scalar_lea.sflag [#allocation3], %s190
          %s192 = sand.u32 %s30, 1
          %s193 = smul.addr %s192, 2
          %s194 = scalar_lea.vmem [#allocation2], %s193
          %s195 = smul.u32 2, %s20
          %197 = vsyncadd %s191, 0
          %s198 = scalar_lea.hbm %s0, %s195
          %s200 = sshll.u32 %s198, 4
          %s201 = int_to_ptr.hbm [resolvable:$true] %s200
          %s202 = sshll.u32 %s194, 4
          %s203 = int_to_ptr.vmem [resolvable:$true] %s202
          %205 = dma.hbm_to_vmem [thread:$0]  %s201, 32, %s203, %s191
        $region28: #{tpu_custom_call.1} parent=23 // pred_fallthru
          _
        // Predicated region
        $region29: #{tpu_custom_call.1} parent=23 // pred_check
          %p206 = pneg %p66
        $region30: #{tpu_custom_call.1} parent=23 // pred_check_branch
          %208 = sbr.rel (%p206) target = $region32
        $region31: #{tpu_custom_call.1} parent=23 // pred_region
          %s209 = sand.u32 %s20, 1
          %s210 = scalar_lea.sflag [#allocation6], %s209
          %s211 = sand.u32 %s56, 1
          %s212 = smul.addr %s211, 2
          %s213 = scalar_lea.vmem [#allocation5], %s212
          %s214 = smul.u32 2, %s20
          %216 = vsyncadd %s210, 0
          %s217 = scalar_lea.hbm %s1, %s214
          %s219 = sshll.u32 %s217, 4
          %s220 = int_to_ptr.hbm [resolvable:$true] %s219
          %s221 = sshll.u32 %s213, 4
          %s222 = int_to_ptr.vmem [resolvable:$true] %s221
          %224 = dma.hbm_to_vmem [thread:$0]  %s220, 32, %s222, %s210
        $region32: #{tpu_custom_call.1} parent=23 // pred_fallthru
          _
      $region24: #{tpu_custom_call.1} parent=5 // pred_fallthru
        _
      %p225 = scmp.le.s32.totalorder 1, %s20
      %p226 = scmp.lt.s32.totalorder %s20, 3
      %p227 = pnand %p225, %p226
      %p228 = pneg %p227
      // Predicated region
      $region33: #{tpu_custom_call.1} parent=5 // pred_check
        _
      $region34: #{tpu_custom_call.1} parent=5 // pred_check_branch
        %230 = sbr.rel (%p227) target = $region36
      $region35: #{tpu_custom_call.1} parent=5 // pred_region
        %s231 = ssub.s32 %s20, 1
        %s232 = sand.u32 %s33, 1
        %s233 = scalar_lea.sflag [#allocation3], %s232
        %s234 = sand.u32 %s33, 1
        %s235 = smul.addr %s234, 2
        %s236 = scalar_lea.vmem [#allocation2], %s235
        // Predicated region
        $region37: #{tpu_custom_call.1} parent=35 // pred_check
          %p237 = pneg %p46
        $region38: #{tpu_custom_call.1} parent=35 // pred_check_branch
          %239 = sbr.rel (%p237) target = $region40
        $region39: #{tpu_custom_call.1} parent=35 // pred_region
          %241 = dma.done %s233, 32
        $region40: #{tpu_custom_call.1} parent=35 // pred_fallthru
          _
        %s242 = sand.u32 %s25, 1
        %s243 = scalar_lea.sflag [#allocation6], %s242
        %s244 = sand.u32 %s59, 1
        %s245 = smul.addr %s244, 2
        %s246 = scalar_lea.vmem [#allocation5], %s245
        // Predicated region
        $region41: #{tpu_custom_call.1} parent=35 // pred_check
          %p247 = pneg %p72
        $region42: #{tpu_custom_call.1} parent=35 // pred_check_branch
          %249 = sbr.rel (%p247) target = $region44
        $region43: #{tpu_custom_call.1} parent=35 // pred_region
          %251 = dma.done %s243, 32
        $region44: #{tpu_custom_call.1} parent=35 // pred_fallthru
          _
        // Predicated region
        $region45: #{tpu_custom_call.1} parent=35 // pred_check
          %p252 = pneg %p93
        $region46: #{tpu_custom_call.1} parent=35 // pred_check_branch
          %254 = sbr.rel (%p252) target = $region48
        $region47: #{tpu_custom_call.1} parent=35 // pred_region
          %256 = dma.done [#allocation6], 640
        $region48: #{tpu_custom_call.1} parent=35 // pred_fallthru
          _
        // Predicated region
        $region49: #{tpu_custom_call.1} parent=35 // pred_check
          %p257 = pneg %p114
        $region50: #{tpu_custom_call.1} parent=35 // pred_check_branch
          %259 = sbr.rel (%p257) target = $region52
        $region51: #{tpu_custom_call.1} parent=35 // pred_region
          %261 = dma.done [#allocation9], 640
        $region52: #{tpu_custom_call.1} parent=35 // pred_fallthru
          _
        %s262 = sand.u32 %s33, 1
        %s263 = scalar_lea.sflag [#allocation3], %s262
        %s264 = sand.u32 %s33, 1
        %s265 = smul.addr %s264, 2
        %s266 = scalar_lea.vmem [#allocation2], %s265
        %p267 = pneg %p46
        %p268 = pneg %p43
        %s269 = sand.u32 %s25, 1
        %s270 = scalar_lea.sflag [#allocation6], %s269
        %s271 = sand.u32 %s59, 1
        %s272 = smul.addr %s271, 2
        %s273 = scalar_lea.vmem [#allocation5], %s272
        %p274 = pneg %p72
        %p275 = pneg %p69
        %p276 = pneg %p93
        %p277 = pneg %p90
        %p278 = pneg %p114
        %p279 = pneg %p111
        %p280 = pneg %p140
        %p281 = pneg %p137
        %s282 = sand.u32 %s127, 1
        %s283 = scalar_lea.sflag [#allocation4], %s282
        %s284 = sand.u32 %s127, 1
        %s285 = smul.addr %s284, 2
        %s286 = scalar_lea.vmem [#allocation10], %s285
        %s287 = smul.u32 2, %s25
        %s288 = smul.u32 2, %s25
        %s289 = smul.u32 2, %s25
        %v290 = vld [vmem:[%s236] sm:$0x3]
        %v291 = vld [vmem:[%s246] sm:$0x3]
        %v292 = vlaneseq
        %v293 = vshrl.u32 %v292, 7
        %v294 = vadd.s32 %v293, 8
        %v295 = vadd.s32 %v293, 16
        %v296 = vadd.s32 %v293, 24
        %v297 = vadd.s32 %v293, 32
        %v298 = vadd.s32 %v293, 40
        %v299 = vadd.s32 %v293, 48
        %v300 = vadd.s32 %v293, 56
        %v301 = vadd.s32 %v293, 64
        %v302 = vadd.s32 %v293, 72
        %v303 = vadd.s32 %v293, 80
        %v304 = vadd.s32 %v293, 88
        %v305 = vadd.s32 %v293, 96
        %v306 = vadd.s32 %v293, 104
        %v307 = vadd.s32 %v293, 112
        %v308 = vadd.s32 %v293, 120
        %v309 = vperm.slane %v290, 0
        %v310 = vperm.slane %v290, 1
        %vm311 = vcmp.eq.s32.totalorder %v293, %v309
        %vm312 = vcmp.eq.s32.totalorder %v293, %v310
        %vm313 = vcmp.eq.s32.totalorder %v294, %v309
        %vm314 = vcmp.eq.s32.totalorder %v294, %v310
        %vm315 = vcmp.eq.s32.totalorder %v295, %v309
        %vm316 = vcmp.eq.s32.totalorder %v295, %v310
        %vm317 = vcmp.eq.s32.totalorder %v296, %v309
        %vm318 = vcmp.eq.s32.totalorder %v296, %v310
        %vm319 = vcmp.eq.s32.totalorder %v297, %v309
        %vm320 = vcmp.eq.s32.totalorder %v297, %v310
        %vm321 = vcmp.eq.s32.totalorder %v298, %v309
        %vm322 = vcmp.eq.s32.totalorder %v298, %v310
        %vm323 = vcmp.eq.s32.totalorder %v299, %v309
        %vm324 = vcmp.eq.s32.totalorder %v299, %v310
        %vm325 = vcmp.eq.s32.totalorder %v300, %v309
        %vm326 = vcmp.eq.s32.totalorder %v300, %v310
        %vm327 = vcmp.eq.s32.totalorder %v301, %v309
        %vm328 = vcmp.eq.s32.totalorder %v301, %v310
        %vm329 = vcmp.eq.s32.totalorder %v302, %v309
        %vm330 = vcmp.eq.s32.totalorder %v302, %v310
        %vm331 = vcmp.eq.s32.totalorder %v303, %v309
        %vm332 = vcmp.eq.s32.totalorder %v303, %v310
        %vm333 = vcmp.eq.s32.totalorder %v304, %v309
        %vm334 = vcmp.eq.s32.totalorder %v304, %v310
        %vm335 = vcmp.eq.s32.totalorder %v305, %v309
        %vm336 = vcmp.eq.s32.totalorder %v305, %v310
        %vm337 = vcmp.eq.s32.totalorder %v306, %v309
        %vm338 = vcmp.eq.s32.totalorder %v306, %v310
        %vm339 = vcmp.eq.s32.totalorder %v307, %v309
        %vm340 = vcmp.eq.s32.totalorder %v307, %v310
        %vm341 = vcmp.eq.s32.totalorder %v308, %v309
        %vm342 = vcmp.eq.s32.totalorder %v308, %v310
        %v343 = vsel %vm311, 1, 0
        %v344 = vsel %vm312, 1, 0
        %v345 = vsel %vm313, 1, 0
        %v346 = vsel %vm314, 1, 0
        %v347 = vsel %vm315, 1, 0
        %v348 = vsel %vm316, 1, 0
        %v349 = vsel %vm317, 1, 0
        %v350 = vsel %vm318, 1, 0
        %v351 = vsel %vm319, 1, 0
        %v352 = vsel %vm320, 1, 0
        %v353 = vsel %vm321, 1, 0
        %v354 = vsel %vm322, 1, 0
        %v355 = vsel %vm323, 1, 0
        %v356 = vsel %vm324, 1, 0
        %v357 = vsel %vm325, 1, 0
        %v358 = vsel %vm326, 1, 0
        %v359 = vsel %vm327, 1, 0
        %v360 = vsel %vm328, 1, 0
        %v361 = vsel %vm329, 1, 0
        %v362 = vsel %vm330, 1, 0
        %v363 = vsel %vm331, 1, 0
        %v364 = vsel %vm332, 1, 0
        %v365 = vsel %vm333, 1, 0
        %v366 = vsel %vm334, 1, 0
        %v367 = vsel %vm335, 1, 0
        %v368 = vsel %vm336, 1, 0
        %v369 = vsel %vm337, 1, 0
        %v370 = vsel %vm338, 1, 0
        %v371 = vsel %vm339, 1, 0
        %v372 = vsel %vm340, 1, 0
        %v373 = vsel %vm341, 1, 0
        %v374 = vsel %vm342, 1, 0
        %v375 = vcvt.s32.f32 %v343
        %v376 = vcvt.s32.f32 %v344
        %v377 = vcvt.s32.f32 %v345
        %v378 = vcvt.s32.f32 %v346
        %v379 = vcvt.s32.f32 %v347
        %v380 = vcvt.s32.f32 %v348
        %v381 = vcvt.s32.f32 %v349
        %v382 = vcvt.s32.f32 %v350
        %v383 = vcvt.s32.f32 %v351
        %v384 = vcvt.s32.f32 %v352
        %v385 = vcvt.s32.f32 %v353
        %v386 = vcvt.s32.f32 %v354
        %v387 = vcvt.s32.f32 %v355
        %v388 = vcvt.s32.f32 %v356
        %v389 = vcvt.s32.f32 %v357
        %v390 = vcvt.s32.f32 %v358
        %v391 = vcvt.s32.f32 %v359
        %v392 = vcvt.s32.f32 %v360
        %v393 = vcvt.s32.f32 %v361
        %v394 = vcvt.s32.f32 %v362
        %v395 = vcvt.s32.f32 %v363
        %v396 = vcvt.s32.f32 %v364
        %v397 = vcvt.s32.f32 %v365
        %v398 = vcvt.s32.f32 %v366
        %v399 = vcvt.s32.f32 %v367
        %v400 = vcvt.s32.f32 %v368
        %v401 = vcvt.s32.f32 %v369
        %v402 = vcvt.s32.f32 %v370
        %v403 = vcvt.s32.f32 %v371
        %v404 = vcvt.s32.f32 %v372
        %v405 = vcvt.s32.f32 %v373
        %v406 = vcvt.s32.f32 %v374
        %v407 = vperm.slane %v291, 0
        %v408 = vperm.slane %v291, 1
        %vm409 = vcmp.eq.s32.totalorder %v293, %v407
        %vm410 = vcmp.eq.s32.totalorder %v293, %v408
        %vm411 = vcmp.eq.s32.totalorder %v294, %v407
        %vm412 = vcmp.eq.s32.totalorder %v294, %v408
        %vm413 = vcmp.eq.s32.totalorder %v295, %v407
        %vm414 = vcmp.eq.s32.totalorder %v295, %v408
        %vm415 = vcmp.eq.s32.totalorder %v296, %v407
        %vm416 = vcmp.eq.s32.totalorder %v296, %v408
        %vm417 = vcmp.eq.s32.totalorder %v297, %v407
        %vm418 = vcmp.eq.s32.totalorder %v297, %v408
        %vm419 = vcmp.eq.s32.totalorder %v298, %v407
        %vm420 = vcmp.eq.s32.totalorder %v298, %v408
        %vm421 = vcmp.eq.s32.totalorder %v299, %v407
        %vm422 = vcmp.eq.s32.totalorder %v299, %v408
        %vm423 = vcmp.eq.s32.totalorder %v300, %v407
        %vm424 = vcmp.eq.s32.totalorder %v300, %v408
        %vm425 = vcmp.eq.s32.totalorder %v301, %v407
        %vm426 = vcmp.eq.s32.totalorder %v301, %v408
        %vm427 = vcmp.eq.s32.totalorder %v302, %v407
        %vm428 = vcmp.eq.s32.totalorder %v302, %v408
        %vm429 = vcmp.eq.s32.totalorder %v303, %v407
        %vm430 = vcmp.eq.s32.totalorder %v303, %v408
        %vm431 = vcmp.eq.s32.totalorder %v304, %v407
        %vm432 = vcmp.eq.s32.totalorder %v304, %v408
        %vm433 = vcmp.eq.s32.totalorder %v305, %v407
        %vm434 = vcmp.eq.s32.totalorder %v305, %v408
        %vm435 = vcmp.eq.s32.totalorder %v306, %v407
        %vm436 = vcmp.eq.s32.totalorder %v306, %v408
        %vm437 = vcmp.eq.s32.totalorder %v307, %v407
        %vm438 = vcmp.eq.s32.totalorder %v307, %v408
        %vm439 = vcmp.eq.s32.totalorder %v308, %v407
        %vm440 = vcmp.eq.s32.totalorder %v308, %v408
        %v441 = vsel %vm409, 1, 0
        %v442 = vsel %vm410, 1, 0
        %v443 = vsel %vm411, 1, 0
        %v444 = vsel %vm412, 1, 0
        %v445 = vsel %vm413, 1, 0
        %v446 = vsel %vm414, 1, 0
        %v447 = vsel %vm415, 1, 0
        %v448 = vsel %vm416, 1, 0
        %v449 = vsel %vm417, 1, 0
        %v450 = vsel %vm418, 1, 0
        %v451 = vsel %vm419, 1, 0
        %v452 = vsel %vm420, 1, 0
        %v453 = vsel %vm421, 1, 0
        %v454 = vsel %vm422, 1, 0
        %v455 = vsel %vm423, 1, 0
        %v456 = vsel %vm424, 1, 0
        %v457 = vsel %vm425, 1, 0
        %v458 = vsel %vm426, 1, 0
        %v459 = vsel %vm427, 1, 0
        %v460 = vsel %vm428, 1, 0
        %v461 = vsel %vm429, 1, 0
        %v462 = vsel %vm430, 1, 0
        %v463 = vsel %vm431, 1, 0
        %v464 = vsel %vm432, 1, 0
        %v465 = vsel %vm433, 1, 0
        %v466 = vsel %vm434, 1, 0
        %v467 = vsel %vm435, 1, 0
        %v468 = vsel %vm436, 1, 0
        %v469 = vsel %vm437, 1, 0
        %v470 = vsel %vm438, 1, 0
        %v471 = vsel %vm439, 1, 0
        %v472 = vsel %vm440, 1, 0
        %v473 = vcvt.s32.f32 %v441
        %v474 = vcvt.s32.f32 %v442
        %v475 = vcvt.s32.f32 %v443
        %v476 = vcvt.s32.f32 %v444
        %v477 = vcvt.s32.f32 %v445
        %v478 = vcvt.s32.f32 %v446
        %v479 = vcvt.s32.f32 %v447
        %v480 = vcvt.s32.f32 %v448
        %v481 = vcvt.s32.f32 %v449
        %v482 = vcvt.s32.f32 %v450
        %v483 = vcvt.s32.f32 %v451
        %v484 = vcvt.s32.f32 %v452
        %v485 = vcvt.s32.f32 %v453
        %v486 = vcvt.s32.f32 %v454
        %v487 = vcvt.s32.f32 %v455
        %v488 = vcvt.s32.f32 %v456
        %v489 = vcvt.s32.f32 %v457
        %v490 = vcvt.s32.f32 %v458
        %v491 = vcvt.s32.f32 %v459
        %v492 = vcvt.s32.f32 %v460
        %v493 = vcvt.s32.f32 %v461
        %v494 = vcvt.s32.f32 %v462
        %v495 = vcvt.s32.f32 %v463
        %v496 = vcvt.s32.f32 %v464
        %v497 = vcvt.s32.f32 %v465
        %v498 = vcvt.s32.f32 %v466
        %v499 = vcvt.s32.f32 %v467
        %v500 = vcvt.s32.f32 %v468
        %v501 = vcvt.s32.f32 %v469
        %v502 = vcvt.s32.f32 %v470
        %v503 = vcvt.s32.f32 %v471
        %v504 = vcvt.s32.f32 %v472
        %v505 = vld [vmem:[#allocation7] sm:$0xff]
        %v506 = vld [vmem:[#allocation7 + $0x8] sm:$0xff]
        %v507 = vld [vmem:[#allocation7 + $0x10] sm:$0xff]
        %v508 = vld [vmem:[#allocation7 + $0x18] sm:$0xff]
        %v509 = vld [vmem:[#allocation7 + $0x20] sm:$0x3]
        %510 = vmatpush.msra.mxu0 %v405
        %511 = vmatpush.msra.mxu0 %v403
        %512 = vmatpush.msra.mxu0 %v401
        %513 = vmatpush.msra.mxu0 %v399
        %514 = vmatpush.msra.mxu0 %v397
        %515 = vmatpush.msra.mxu0 %v395
        %516 = vmatpush.msra.mxu0 %v393
        %517 = vmatpush.msra.mxu0 %v391
        %518 = vmatpush.msra.mxu0 %v389
        %519 = vmatpush.msra.mxu0 %v387
        %520 = vmatpush.msra.mxu0 %v385
        %521 = vmatpush.msra.mxu0 %v383
        %522 = vmatpush.msra.mxu0 %v381
        %523 = vmatpush.msra.mxu0 %v379
        %524 = vmatpush.msra.mxu0 %v377
        %525 = vmatpush.msra.mxu0 %v375
        %526 = vmatmul.f32.gmra.mxu0 %v505
        %v527 = vpop.f32.mrf.mxu0
        %v528 = vadd.f32 0.0, %v527
        %529 = vmatmul.f32.gmra.mxu0 %v506
        %v530 = vpop.f32.mrf.mxu0
        %v531 = vadd.f32 0.0, %v530
        %532 = vmatmul.f32.gmra.mxu0 %v507
        %v533 = vpop.f32.mrf.mxu0
        %v534 = vadd.f32 0.0, %v533
        %535 = vmatmul.f32.gmra.mxu0 %v508
        %v536 = vpop.f32.mrf.mxu0
        %v537 = vadd.f32 0.0, %v536
        %538 = vmatmul.f32.gmra.mxu0 %v509
        %v539 = vpop.f32.mrf.mxu0
        %v540 = vadd.f32 0.0, %v539
        %541 = vdwg.mxu0
        %542 = vmatpush.msra.mxu0 %v406
        %543 = vmatpush.msra.mxu0 %v404
        %544 = vmatpush.msra.mxu0 %v402
        %545 = vmatpush.msra.mxu0 %v400
        %546 = vmatpush.msra.mxu0 %v398
        %547 = vmatpush.msra.mxu0 %v396
        %548 = vmatpush.msra.mxu0 %v394
        %549 = vmatpush.msra.mxu0 %v392
        %550 = vmatpush.msra.mxu0 %v390
        %551 = vmatpush.msra.mxu0 %v388
        %552 = vmatpush.msra.mxu0 %v386
        %553 = vmatpush.msra.mxu0 %v384
        %554 = vmatpush.msra.mxu0 %v382
        %555 = vmatpush.msra.mxu0 %v380
        %556 = vmatpush.msra.mxu0 %v378
        %557 = vmatpush.msra.mxu0 %v376
        %558 = vmatmul.f32.gmra.mxu0 %v505
        %v559 = vpop.f32.mrf.mxu0
        %v560 = vadd.f32 0.0, %v559
        %561 = vmatmul.f32.gmra.mxu0 %v506
        %v562 = vpop.f32.mrf.mxu0
        %v563 = vadd.f32 0.0, %v562
        %564 = vmatmul.f32.gmra.mxu0 %v507
        %v565 = vpop.f32.mrf.mxu0
        %v566 = vadd.f32 0.0, %v565
        %567 = vmatmul.f32.gmra.mxu0 %v508
        %v568 = vpop.f32.mrf.mxu0
        %v569 = vadd.f32 0.0, %v568
        %570 = vmatmul.f32.gmra.mxu0 %v509
        %v571 = vpop.f32.mrf.mxu0
        %v572 = vadd.f32 0.0, %v571
        %573 = vdwg.mxu0
        %v574 = vld [vmem:[#allocation8] sm:$0xff]
        %v575 = vld [vmem:[#allocation8 + $0x8] sm:$0xff]
        %v576 = vld [vmem:[#allocation8 + $0x10] sm:$0xff]
        %v577 = vld [vmem:[#allocation8 + $0x18] sm:$0xff]
        %v578 = vld [vmem:[#allocation8 + $0x20] sm:$0x3]
        %579 = vmatpush.msra.mxu0 %v503
        %580 = vmatpush.msra.mxu0 %v501
        %581 = vmatpush.msra.mxu0 %v499
        %582 = vmatpush.msra.mxu0 %v497
        %583 = vmatpush.msra.mxu0 %v495
        %584 = vmatpush.msra.mxu0 %v493
        %585 = vmatpush.msra.mxu0 %v491
        %586 = vmatpush.msra.mxu0 %v489
        %587 = vmatpush.msra.mxu0 %v487
        %588 = vmatpush.msra.mxu0 %v485
        %589 = vmatpush.msra.mxu0 %v483
        %590 = vmatpush.msra.mxu0 %v481
        %591 = vmatpush.msra.mxu0 %v479
        %592 = vmatpush.msra.mxu0 %v477
        %593 = vmatpush.msra.mxu0 %v475
        %594 = vmatpush.msra.mxu0 %v473
        %595 = vmatmul.f32.gmra.mxu0 %v574
        %v596 = vpop.f32.mrf.mxu0
        %v597 = vadd.f32 0.0, %v596
        %598 = vmatmul.f32.gmra.mxu0 %v575
        %v599 = vpop.f32.mrf.mxu0
        %v600 = vadd.f32 0.0, %v599
        %601 = vmatmul.f32.gmra.mxu0 %v576
        %v602 = vpop.f32.mrf.mxu0
        %v603 = vadd.f32 0.0, %v602
        %604 = vmatmul.f32.gmra.mxu0 %v577
        %v605 = vpop.f32.mrf.mxu0
        %v606 = vadd.f32 0.0, %v605
        %607 = vmatmul.f32.gmra.mxu0 %v578
        %v608 = vpop.f32.mrf.mxu0
        %v609 = vadd.f32 0.0, %v608
        %610 = vdwg.mxu0
        %611 = vmatpush.msra.mxu0 %v504
        %612 = vmatpush.msra.mxu0 %v502
        %613 = vmatpush.msra.mxu0 %v500
        %614 = vmatpush.msra.mxu0 %v498
        %615 = vmatpush.msra.mxu0 %v496
        %616 = vmatpush.msra.mxu0 %v494
        %617 = vmatpush.msra.mxu0 %v492
        %618 = vmatpush.msra.mxu0 %v490
        %619 = vmatpush.msra.mxu0 %v488
        %620 = vmatpush.msra.mxu0 %v486
        %621 = vmatpush.msra.mxu0 %v484
        %622 = vmatpush.msra.mxu0 %v482
        %623 = vmatpush.msra.mxu0 %v480
        %624 = vmatpush.msra.mxu0 %v478
        %625 = vmatpush.msra.mxu0 %v476
        %626 = vmatpush.msra.mxu0 %v474
        %627 = vmatmul.f32.gmra.mxu0 %v574
        %v628 = vpop.f32.mrf.mxu0
        %v629 = vadd.f32 0.0, %v628
        %630 = vmatmul.f32.gmra.mxu0 %v575
        %v631 = vpop.f32.mrf.mxu0
        %v632 = vadd.f32 0.0, %v631
        %633 = vmatmul.f32.gmra.mxu0 %v576
        %v634 = vpop.f32.mrf.mxu0
        %v635 = vadd.f32 0.0, %v634
        %636 = vmatmul.f32.gmra.mxu0 %v577
        %v637 = vpop.f32.mrf.mxu0
        %v638 = vadd.f32 0.0, %v637
        %639 = vmatmul.f32.gmra.mxu0 %v578
        %v640 = vpop.f32.mrf.mxu0
        %v641 = vadd.f32 0.0, %v640
        %642 = vdwg.mxu0
        %v643 = vmul.f32 %v528, %v597
        %v644 = vmul.f32 %v560, %v629
        %v645 = vmul.f32 %v531, %v600
        %v646 = vmul.f32 %v563, %v632
        %v647 = vmul.f32 %v534, %v603
        %v648 = vmul.f32 %v566, %v635
        %v649 = vmul.f32 %v537, %v606
        %v650 = vmul.f32 %v569, %v638
        %v651 = vmul.f32 %v540, %v609
        %v652 = vmul.f32 %v572, %v641
        %v653 = vadd.f32 %v643, %v645
        %v654 = vadd.f32 %v653, %v647
        %v655 = vadd.f32 %v654, %v649
        %vm656 = vcmask 1041408
        %v657 = vsel %vm656, %v651, 0.0
        %v658 = vadd.f32 %v655, %v657
        %v659 = vrot.slane %v658, 4
        %v660 = vadd.f32 %v658, %v659
        %v661 = vrot.slane %v660, 2
        %v662 = vadd.f32 %v660, %v661
        %v663 = vrot.slane %v662, 1
        %v664 = vadd.f32 %v662, %v663
        %v665 = vadd.f32 %v644, %v646
        %v666 = vadd.f32 %v665, %v648
        %v667 = vadd.f32 %v666, %v650
        %v668 = vsel %vm656, %v652, 0.0
        %v669 = vadd.f32 %v667, %v668
        %v670 = vrot.slane %v669, 4
        %v671 = vadd.f32 %v669, %v670
        %v672 = vrot.slane %v671, 2
        %v673 = vadd.f32 %v671, %v672
        %v674 = vrot.slane %v673, 1
        %v675 = vadd.f32 %v673, %v674
        %v678 = vrot.slane %v675, 7
        %vm679 = vcmask 1040384
        %v680 = vsel %vm679, %v664, %v678
        %v682 = vlaneseq
        %vm683 = vcmp.ge.s32.totalorder %v682, 0
        %vm684 = vcmp.lt.s32.totalorder %v682, 256
        %vm685 = vmand %vm683, %vm684
        %686 = vst.msk [vmem:[%s286] sm:$0x3] %vm685, %v680
        %s687 = sand.u32 %s127, 1
        %s688 = scalar_lea.sflag [#allocation4], %s687
        %s689 = sand.u32 %s127, 1
        %s690 = smul.addr %s689, 2
        %s691 = scalar_lea.vmem [#allocation10], %s690
        // Predicated region
        $region53: #{tpu_custom_call.1} parent=35 // pred_check
          %p692 = pneg %p137
        $region54: #{tpu_custom_call.1} parent=35 // pred_check_branch
          %694 = sbr.rel (%p692) target = $region56
        $region55: #{tpu_custom_call.1} parent=35 // pred_region
          %s695 = smul.u32 2, %s25
          %697 = vsyncadd %s688, 0
          %s698 = scalar_lea.hbm %s4, %s695
          %s700 = sshll.u32 %s691, 4
          %s701 = int_to_ptr.vmem [resolvable:$true] %s700
          %s702 = sshll.u32 %s698, 4
          %s703 = int_to_ptr.hbm [resolvable:$true] %s702
          %705 = dma.vmem_to_hbm [thread:$0]  %s701, 32, %s703, %s688
        $region56: #{tpu_custom_call.1} parent=35 // pred_fallthru
          _
      $region36: #{tpu_custom_call.1} parent=5 // pred_fallthru
        _
      %p706 = scmp.le.s32.totalorder 2, %s20
      // Predicated region
      $region57: #{tpu_custom_call.1} parent=5 // pred_check
        %p707 = pneg %p706
      $region58: #{tpu_custom_call.1} parent=5 // pred_check_branch
        %709 = sbr.rel (%p707) target = $region60
      $region59: #{tpu_custom_call.1} parent=5 // pred_region
        %s710 = ssub.s32 %s20, 2
        // Predicated region
        $region61: #{tpu_custom_call.1} parent=59 // pred_check
          %p711 = pneg %p143
        $region62: #{tpu_custom_call.1} parent=59 // pred_check_branch
          %713 = sbr.rel (%p711) target = $region64
        $region63: #{tpu_custom_call.1} parent=59 // pred_region
          %s714 = sand.u32 %s128, 1
          %s715 = scalar_lea.sflag [#allocation4], %s714
          %s716 = sand.u32 %s128, 1
          %s717 = smul.addr %s716, 2
          %s718 = scalar_lea.vmem [#allocation10], %s717
          %720 = dma.done %s715, 32
        $region64: #{tpu_custom_call.1} parent=59 // pred_fallthru
          _
      $region60: #{tpu_custom_call.1} parent=5 // pred_fallthru
        _
    $region6: #{tpu_custom_call.1} parent=1 // loop_footer
      %s24 = sadd.s32 1, %s20
    $region7: #{tpu_custom_call.1} parent=1 // loop_footer_branch
      %19 = sbr.rel target = $region3
    $region8: #{tpu_custom_call.1} parent=1 // loop_exit
      _
    %721 = vsyncpa [#allocation3], 1
    %s722 = scalar_lea.sflag [#allocation3], 1
    %723 = vsyncpa %s722, 1
    %724 = vsyncpa [#allocation6], 1
    %s725 = scalar_lea.sflag [#allocation6], 1
    %726 = vsyncpa %s725, 1
    %727 = vsyncpa [#allocation9], 1
    %728 = vsyncpa [#allocation4], 1
    %s729 = scalar_lea.sflag [#allocation4], 1
    %730 = vsyncpa %s729, 1

</llo_original>
